<compile_context>
chip_gen: v5e
topology: v5e:2x2
jax: 0.10.0
libtpu: 0.0.40
codegen_flags: <defaults>
</compile_context>

<pallas_src>
import numpy as np
import jax
import jax.numpy as jnp
from jax import lax
from jax.experimental import pallas as pl
from jax.experimental.pallas import tpu as pltpu


_MAX_BLOCK_TOKENS = 512
_RESIDENT_TABLE_BUDGET_BYTES = 40 * 1024 * 1024   # conservative for v7x (64 MiB VMEM)
_HBM_PATH_VMEM_LIMIT = 32 * 1024 * 1024
_RESIDENT_PATH_VMEM_CAP = 48 * 1024 * 1024


# --------------------------- in-kernel dropout -------------------------------

def _dropout_scale(blk, d, base_token, seed, rate):
    """Counter-based Bernoulli keep-mask times 1/(1-rate).

    Pure VPU integer math (lowbias32 hash of the global element index mixed
    with the seed) + a direct uint32 threshold compare.  Works on TPU and in
    interpret mode; deterministic given (seed, token position, column).
    """
    rows = lax.broadcasted_iota(jnp.uint32, (blk, d), 0)
    cols = lax.broadcasted_iota(jnp.uint32, (blk, d), 1)
    gidx = (base_token.astype(jnp.uint32) + rows) * jnp.uint32(d) + cols
    x = gidx ^ (seed.astype(jnp.uint32) * jnp.uint32(0x9E3779B9))
    # lowbias32 finalizer (good avalanche, 3 mul/xor rounds on the VPU)
    x = (x ^ (x >> 16)) * jnp.uint32(0x7FEB352D)
    x = (x ^ (x >> 15)) * jnp.uint32(0x846CA68B)
    x = x ^ (x >> 16)
    threshold = jnp.uint32(int(round(rate * 4294967296.0)) & 0xFFFFFFFF)
    keep = x >= threshold
    return jnp.where(keep, jnp.float32(1.0 / (1.0 - rate)), jnp.float32(0.0))


# --------------------------- resident-table kernel ---------------------------

def _make_resident_kernel(blk, d, rate, apply_dropout):
    def kernel(ids_ref, seed_ref, table_ref, out_ref, rows_ref):
        b = pl.program_id(0)
        base = b * blk
        seed = seed_ref[0]                       # scalar reads up front

        def gather_row(r, carry):
            idx = ids_ref[base + r]
            rows_ref[pl.ds(r, 1), :] = table_ref[pl.ds(idx, 1), :]
            return carry

        lax.fori_loop(0, blk, gather_row, 0, unroll=8)

        x = rows_ref[...]
        if apply_dropout:
            x = x.astype(jnp.float32) * _dropout_scale(blk, d, base, seed, rate)
        out_ref[...] = x.astype(out_ref.dtype)   # one lane-dense full-tile store

    return kernel


# ------------------------ HBM-table (fallback) kernel ------------------------

def _make_hbm_kernel(blk, d, rate, apply_dropout):
    def kernel(ids_ref, seed_ref, table_hbm, out_ref, rows_ref, sems):
        b = pl.program_id(0)
        nb = pl.num_programs(0)
        slot = b % 2
        seed = seed_ref[0]                       # scalar read before any wait
        base = b * blk

        def start_rows(blk_idx, s):
            row0 = blk_idx * blk

            def body(r, carry):
                idx = ids_ref[row0 + r]          # scalar id read before wait
                pltpu.make_async_copy(
                    table_hbm.at[pl.ds(idx, 1), :],
                    rows_ref.at[s, pl.ds(r, 1), :],
                    sems.at[s],
                ).start()
                return carry

            lax.fori_loop(0, blk, body, 0)

        def wait_rows(s):
            def body(r, carry):
                # Wait only needs dst size + semaphore; src kept size-matched.
                pltpu.make_async_copy(
                    table_hbm.at[pl.ds(0, 1), :],
                    rows_ref.at[s, pl.ds(r, 1), :],
                    sems.at[s],
                ).wait()
                return carry

            lax.fori_loop(0, blk, body, 0)

        @pl.when(b == 0)
        def _():                                  # prime slot 0
            start_rows(0, 0)

        @pl.when(b + 1 < nb)
        def _():                                  # prefetch next block first
            start_rows(b + 1, 1 - slot)

        wait_rows(slot)                           # now wait on current block

        x = rows_ref[slot]
        if apply_dropout:
            x = x.astype(jnp.float32) * _dropout_scale(blk, d, base, seed, rate)
        out_ref[...] = x.astype(out_ref.dtype)

    return kernel


# --------------------------------- wrapper -----------------------------------

def _choose_block_tokens(n_tokens, d, itemsize):
    sub = {4: 8, 2: 16, 1: 32}.get(itemsize, 8)   # sublane packing per dtype
    # Prefer >=2 blocks (v7x has 2 TensorCores), keep a multiple of `sub`.
    target = max(sub, -(-n_tokens // 2))
    blk = min(_MAX_BLOCK_TOKENS, -(-target // sub) * sub)
    # Keep double buffers + out buffers comfortably inside the VMEM limit.
    vmem_cap_rows = max(sub, ((24 * 1024 * 1024) // (6 * d * itemsize)) // sub * sub)
    return max(sub, min(blk, vmem_cap_rows))


def embedding_layer_forward(input_ids, table, dropout_rate=0.0, *,
                            deterministic=True, rng_seed=0,
                            force_hbm_table=False):
    """input_ids: int array [T] or [B, T]; table: [vocab, D] embedding table.
    Returns embeddings of shape input_ids.shape + (D,) with dropout applied
    when deterministic=False (training mode)."""
    input_ids = jnp.asarray(input_ids)
    orig_shape = input_ids.shape
    vocab, d = table.shape
    assert d % 128 == 0, "embedding dim must be lane-aligned (multiple of 128)"

    ids_flat = input_ids.reshape(-1).astype(jnp.int32)
    n = int(ids_flat.shape[0])
    itemsize = jnp.dtype(table.dtype).itemsize
    blk = _choose_block_tokens(n, d, itemsize)
    pad = (-n) % blk
    if pad:
        ids_flat = jnp.concatenate([ids_flat, jnp.zeros((pad,), jnp.int32)])
    n_padded = n + pad
    num_blocks = n_padded // blk
    # TODO(synk): for very long sequences (N >> 100K) chunk the call so the
    # scalar-prefetched ids (padded to next_pow2(4N) bytes) stay within SMEM.

    apply_dropout = (float(dropout_rate) > 0.0) and (not deterministic)
    seed_arr = jnp.asarray([rng_seed], jnp.int32)

    table_bytes = vocab * d * itemsize
    buf_bytes = blk * d * itemsize
    resident = (not force_hbm_table) and (
        table_bytes + 6 * buf_bytes + (2 << 20) <= _RESIDENT_TABLE_BUDGET_BYTES)

    out_spec = pl.BlockSpec((blk, d), lambda b, ids, seed: (b, 0))

    if resident:
        kernel = _make_resident_kernel(blk, d, float(dropout_rate), apply_dropout)
        # Constant block index -> table DMA'd to VMEM once, stays resident.
        in_specs = [pl.BlockSpec((vocab, d), lambda b, ids, seed: (0, 0))]
        scratch = [pltpu.VMEM((blk, d), table.dtype)]
        dim_sem = ("parallel",)          # token blocks fully independent
        vmem_limit = int(min(_RESIDENT_PATH_VMEM_CAP,
                             max(_HBM_PATH_VMEM_LIMIT,
                                 table_bytes + 6 * buf_bytes + (4 << 20))))
    else:
        kernel = _make_hbm_kernel(blk, d, float(dropout_rate), apply_dropout)
        in_specs = [pl.BlockSpec(memory_space=pl.ANY)]   # table stays in HBM
        scratch = [pltpu.VMEM((2, blk, d), table.dtype),
                   pltpu.SemaphoreType.DMA((2,))]
        # Cross-step prefetch (block b+1 started at step b) requires the grid
        # axis to execute sequentially.
        dim_sem = ("arbitrary",)
        vmem_limit = _HBM_PATH_VMEM_LIMIT

    out = pl.pallas_call(
        kernel,
        out_shape=jax.ShapeDtypeStruct((n_padded, d), table.dtype),
        grid_spec=pltpu.PrefetchScalarGridSpec(
            num_scalar_prefetch=2,       # (ids, seed) -> SMEM
            grid=(num_blocks,),
            in_specs=in_specs,
            out_specs=out_spec,
            scratch_shapes=scratch),
        compiler_params=pltpu.CompilerParams(
            dimension_semantics=dim_sem,
            vmem_limit_bytes=int(vmem_limit)),
    )(ids_flat, seed_arr, table)

    return out[:n].reshape(orig_shape + (d,))


# ----------------------------------- main ------------------------------------

if __name__ == "__main__":
    B, T = 2, 8            # batched input [batch size x sent len]
    VOCAB, D = 100, 128    # full_dict_size x input_dim (lane-aligned)
    P_DROP = 0.2           # embedding_dropout_rate

    key = jax.random.PRNGKey(0)
    k_ids, k_tab = jax.random.split(key)
    input_ids = jax.random.randint(k_ids, (B, T), 0, VOCAB, dtype=jnp.int32)
    table = jax.random.normal(k_tab, (VOCAB, D), jnp.float32)

    ref = np.asarray(table)[np.asarray(input_ids)]      # [B, T, D]

    # --- eval mode, VMEM-resident-table fast path: exact match to gather ---
    out_eval = embedding_layer_forward(input_ids, table, P_DROP,
                                       deterministic=True)
    jax.block_until_ready(out_eval)
    np.testing.assert_array_equal(np.asarray(out_eval), ref)

    # --- eval mode, forced HBM double-buffered gather path ---
    out_hbm = embedding_layer_forward(input_ids, table, P_DROP,
                                      deterministic=True, force_hbm_table=True)
    jax.block_until_ready(out_hbm)
    np.testing.assert_array_equal(np.asarray(out_hbm), ref)

    # --- non-batched input path ([sent len]) ---
    out_1d = embedding_layer_forward(input_ids[0], table, P_DROP,
                                     deterministic=True)
    jax.block_until_ready(out_1d)
    np.testing.assert_array_equal(np.asarray(out_1d), ref[0])

    # --- train mode: each element is 0 or emb/(1-p); ~p of them dropped ---
    # TODO(synk): dropout mask comes from an in-kernel counter-based hash PRNG,
    # so it is valid Bernoulli dropout but not bitwise identical to torch RNG.
    out_train = embedding_layer_forward(input_ids, table, P_DROP,
                                        deterministic=False, rng_seed=1234)
    jax.block_until_ready(out_train)
    o = np.asarray(out_train)
    scaled = ref / (1.0 - P_DROP)
    is_zero = np.abs(o) < 1e-6
    is_scaled = np.abs(o - scaled) <= 1e-4 * (1.0 + np.abs(scaled))
    assert np.all(is_zero | is_scaled), "dropout produced unexpected values"
    drop_frac = float(is_zero.mean())
    assert 0.05 < drop_frac < 0.40, f"drop fraction {drop_frac} far from p={P_DROP}"

    print("KERNEL_OK")
</pallas_src>

<mosaic_0001>
module attributes {stable_mosaic.version = 11 : i64} {
  func.func @kernel(%arg0: i32, %arg1: memref<16xi32, #tpu.memory_space<smem>>, %arg2: memref<1xi32, #tpu.memory_space<smem>>, %arg3: memref<100x128xf32, #tpu.memory_space<vmem>>, %arg4: memref<8x128xf32, #tpu.memory_space<vmem>>, %arg5: memref<8x128xf32, #tpu.memory_space<vmem>>) attributes {dimension_semantics = [#tpu.dimension_semantics<parallel>], iteration_bounds = array<i64: 2>, scalar_prefetch = 2 : i64, scratch_operands = 1 : i64, tpu.core_type = #tpu.core_type<tc>, window_params = [{pipeline_mode = #tpu.pipeline_mode<synchronous>, transform_indices = @transform_0, window_bounds = array<i64: 100, 128>}, {transform_indices = @transform_1, window_bounds = array<i64: 8, 128>}]} {
    %c8_i32 = arith.constant 8 : i32
    %0 = arith.muli %arg0, %c8_i32 : i32
    %c0_i32 = arith.constant 0 : i32
    %1 = arith.addi %0, %c0_i32 : i32
    %2 = arith.index_cast %1 : i32 to index
    %3 = memref.load %arg1[%2] : memref<16xi32, #tpu.memory_space<smem>>
    %4 = arith.index_cast %3 : i32 to index
    %c0 = arith.constant 0 : index
    %5 = vector.load %arg3[%4, %c0] : memref<100x128xf32, #tpu.memory_space<vmem>>, vector<1x128xf32>
    %6 = arith.index_cast %c0_i32 : i32 to index
    %c0_0 = arith.constant 0 : index
    %7 = vector.load %arg5[%6, %c0_0] : memref<8x128xf32, #tpu.memory_space<vmem>>, vector<1x128xf32>
    tpu.vector_store %arg5[%6, %c0_0], %5 {strides = array<i32>} : memref<8x128xf32, #tpu.memory_space<vmem>>, vector<1x128xf32>,
    %c1_i32 = arith.constant 1 : i32
    %8 = arith.addi %0, %c1_i32 : i32
    %9 = arith.index_cast %8 : i32 to index
    %10 = memref.load %arg1[%9] : memref<16xi32, #tpu.memory_space<smem>>
    %11 = arith.index_cast %10 : i32 to index
    %c0_1 = arith.constant 0 : index
    %12 = vector.load %arg3[%11, %c0_1] : memref<100x128xf32, #tpu.memory_space<vmem>>, vector<1x128xf32>
    %13 = arith.index_cast %c1_i32 : i32 to index
    %c0_2 = arith.constant 0 : index
    %14 = vector.load %arg5[%13, %c0_2] : memref<8x128xf32, #tpu.memory_space<vmem>>, vector<1x128xf32>
    tpu.vector_store %arg5[%13, %c0_2], %12 {strides = array<i32>} : memref<8x128xf32, #tpu.memory_space<vmem>>, vector<1x128xf32>,
    %c2_i32 = arith.constant 2 : i32
    %15 = arith.addi %0, %c2_i32 : i32
    %16 = arith.index_cast %15 : i32 to index
    %17 = memref.load %arg1[%16] : memref<16xi32, #tpu.memory_space<smem>>
    %18 = arith.index_cast %17 : i32 to index
    %c0_3 = arith.constant 0 : index
    %19 = vector.load %arg3[%18, %c0_3] : memref<100x128xf32, #tpu.memory_space<vmem>>, vector<1x128xf32>
    %20 = arith.index_cast %c2_i32 : i32 to index
    %c0_4 = arith.constant 0 : index
    %21 = vector.load %arg5[%20, %c0_4] : memref<8x128xf32, #tpu.memory_space<vmem>>, vector<1x128xf32>
    tpu.vector_store %arg5[%20, %c0_4], %19 {strides = array<i32>} : memref<8x128xf32, #tpu.memory_space<vmem>>, vector<1x128xf32>,
    %c3_i32 = arith.constant 3 : i32
    %22 = arith.addi %0, %c3_i32 : i32
    %23 = arith.index_cast %22 : i32 to index
    %24 = memref.load %arg1[%23] : memref<16xi32, #tpu.memory_space<smem>>
    %25 = arith.index_cast %24 : i32 to index
    %c0_5 = arith.constant 0 : index
    %26 = vector.load %arg3[%25, %c0_5] : memref<100x128xf32, #tpu.memory_space<vmem>>, vector<1x128xf32>
    %27 = arith.index_cast %c3_i32 : i32 to index
    %c0_6 = arith.constant 0 : index
    %28 = vector.load %arg5[%27, %c0_6] : memref<8x128xf32, #tpu.memory_space<vmem>>, vector<1x128xf32>
    tpu.vector_store %arg5[%27, %c0_6], %26 {strides = array<i32>} : memref<8x128xf32, #tpu.memory_space<vmem>>, vector<1x128xf32>,
    %c4_i32 = arith.constant 4 : i32
    %29 = arith.addi %0, %c4_i32 : i32
    %30 = arith.index_cast %29 : i32 to index
    %31 = memref.load %arg1[%30] : memref<16xi32, #tpu.memory_space<smem>>
    %32 = arith.index_cast %31 : i32 to index
    %c0_7 = arith.constant 0 : index
    %33 = vector.load %arg3[%32, %c0_7] : memref<100x128xf32, #tpu.memory_space<vmem>>, vector<1x128xf32>
    %34 = arith.index_cast %c4_i32 : i32 to index
    %c0_8 = arith.constant 0 : index
    %35 = vector.load %arg5[%34, %c0_8] : memref<8x128xf32, #tpu.memory_space<vmem>>, vector<1x128xf32>
    tpu.vector_store %arg5[%34, %c0_8], %33 {strides = array<i32>} : memref<8x128xf32, #tpu.memory_space<vmem>>, vector<1x128xf32>,
    %c5_i32 = arith.constant 5 : i32
    %36 = arith.addi %0, %c5_i32 : i32
    %37 = arith.index_cast %36 : i32 to index
    %38 = memref.load %arg1[%37] : memref<16xi32, #tpu.memory_space<smem>>
    %39 = arith.index_cast %38 : i32 to index
    %c0_9 = arith.constant 0 : index
    %40 = vector.load %arg3[%39, %c0_9] : memref<100x128xf32, #tpu.memory_space<vmem>>, vector<1x128xf32>
    %41 = arith.index_cast %c5_i32 : i32 to index
    %c0_10 = arith.constant 0 : index
    %42 = vector.load %arg5[%41, %c0_10] : memref<8x128xf32, #tpu.memory_space<vmem>>, vector<1x128xf32>
    tpu.vector_store %arg5[%41, %c0_10], %40 {strides = array<i32>} : memref<8x128xf32, #tpu.memory_space<vmem>>, vector<1x128xf32>,
    %c6_i32 = arith.constant 6 : i32
    %43 = arith.addi %0, %c6_i32 : i32
    %44 = arith.index_cast %43 : i32 to index
    %45 = memref.load %arg1[%44] : memref<16xi32, #tpu.memory_space<smem>>
    %46 = arith.index_cast %45 : i32 to index
    %c0_11 = arith.constant 0 : index
    %47 = vector.load %arg3[%46, %c0_11] : memref<100x128xf32, #tpu.memory_space<vmem>>, vector<1x128xf32>
    %48 = arith.index_cast %c6_i32 : i32 to index
    %c0_12 = arith.constant 0 : index
    %49 = vector.load %arg5[%48, %c0_12] : memref<8x128xf32, #tpu.memory_space<vmem>>, vector<1x128xf32>
    tpu.vector_store %arg5[%48, %c0_12], %47 {strides = array<i32>} : memref<8x128xf32, #tpu.memory_space<vmem>>, vector<1x128xf32>,
    %c7_i32 = arith.constant 7 : i32
    %50 = arith.addi %0, %c7_i32 : i32
    %51 = arith.index_cast %50 : i32 to index
    %52 = memref.load %arg1[%51] : memref<16xi32, #tpu.memory_space<smem>>
    %53 = arith.index_cast %52 : i32 to index
    %c0_13 = arith.constant 0 : index
    %54 = vector.load %arg3[%53, %c0_13] : memref<100x128xf32, #tpu.memory_space<vmem>>, vector<1x128xf32>
    %55 = arith.index_cast %c7_i32 : i32 to index
    %c0_14 = arith.constant 0 : index
    %56 = vector.load %arg5[%55, %c0_14] : memref<8x128xf32, #tpu.memory_space<vmem>>, vector<1x128xf32>
    tpu.vector_store %arg5[%55, %c0_14], %54 {strides = array<i32>} : memref<8x128xf32, #tpu.memory_space<vmem>>, vector<1x128xf32>,
    %c8_i32_15 = arith.constant 8 : i32
    %c0_16 = arith.constant 0 : index
    %c0_17 = arith.constant 0 : index
    %57 = vector.load %arg5[%c0_16, %c0_17] : memref<8x128xf32, #tpu.memory_space<vmem>>, vector<8x128xf32>
    %c0_18 = arith.constant 0 : index
    %c0_19 = arith.constant 0 : index
    %58 = vector.load %arg4[%c0_18, %c0_19] : memref<8x128xf32, #tpu.memory_space<vmem>>, vector<8x128xf32>
    tpu.vector_store %arg4[%c0_18, %c0_19], %57 {strides = array<i32>} : memref<8x128xf32, #tpu.memory_space<vmem>>, vector<8x128xf32>,
    return
  }
  func.func @transform_0(%arg0: i32, %arg1: memref<16xi32, #tpu.memory_space<smem>>, %arg2: memref<1xi32, #tpu.memory_space<smem>>) -> (i32, i32) {
    %c0_i32 = arith.constant 0 : i32
    %c0_i32_0 = arith.constant 0 : i32
    %c0_i32_1 = arith.constant 0 : i32
    return %c0_i32, %c0_i32_0 : i32, i32
  }
  func.func @transform_1(%arg0: i32, %arg1: memref<16xi32, #tpu.memory_space<smem>>, %arg2: memref<1xi32, #tpu.memory_space<smem>>) -> (i32, i32) {
    %c0_i32 = arith.constant 0 : i32
    %c0_i32_0 = arith.constant 0 : i32
    return %arg0, %c0_i32 : i32, i32
  }
}

</mosaic_0001>

<llo_original>
// kernel: tpu_custom_call.1
$region0: #{tpu_custom_call.1}
  #allocation0 [shape = 'u32[]', space=smem, size = 0x4, offset = 0x4, fixed_abs, tag = 'smem constant byte address 0x4 - core index']
  #allocation1 [shape = 'u32[72,128]{1,0:T(1,128)}', space=vmem, size = 0x9000, scoped, tag = 'internal scratch']
  #allocation2 [shape = 'f32[8,128]{1,0:T(8,128)}', space=vmem, size = 0x1000, scoped, tag = 'scratch operand']
  #allocation3 [shape = 's32[1]{0}', space=sflag, size = 0x4, scoped, tag = 'scoped memory for tpu_custom_call.1']
  #allocation4 [shape = 'u8[512]{0}', space=smem, size = 0x200, scoped, tag = 'prefetched SMEM operand 0']
  #allocation5 [shape = 's32[1]{0:T(128)S(6)}', space=smem, size = 0x200, scoped, tag = 'prefetched SMEM operand 1']
  %s0 = inlined_call_operand.vmem [shape: s32[16], index: 0, kind: input, shape index: {}]
  %s1 = inlined_call_operand.<no memory space> [shape: s32[1], index: 1, kind: input, shape index: {}]
  %s2 = inlined_call_operand.hbm [shape: f32[100,128], index: 2, kind: input, shape index: {}]
  %s3 = inlined_call_operand.hbm [shape: f32[16,128], index: 3, kind: output, shape index: {}]
  %s4 = sld [smem:[#allocation0]]
  $region41: #{tpu_custom_call.1} parent=0
    _
  %s6 = ssub.s32 1, %s4
  %s7 = scalar_select 0, %s6, %s4
  %s9 = sshll.u32 %s0, 4
  %s10 = int_to_ptr.vmem [resolvable:$true] %s9
  %12 = dma.vmem_to_smem %s10, 16, [#allocation4], [#allocation3]
  %13 = sst [smem:[#allocation5]] %s1
  %15 = dma.done [#allocation3], 16
  %16 = sfence
  $region1: #{tpu_custom_call.1} parent=0
    #allocation6 [shape = 'u8[53248]{0}', space=vmem, size = 0xd000, scoped, tag = 'input window, operand 2, single buffered']
    #allocation7 [shape = 's32[2]{0}', space=sflag, size = 0x8, scoped, tag = 'scoped memory for tpu_custom_call.1']
    #allocation8 [shape = 's32[2]{0}', space=sflag, size = 0x8, scoped, tag = 'scoped memory for tpu_custom_call.1']
    #allocation9 [shape = 'u8[8192]{0}', space=vmem, size = 0x2000, scoped, tag = 'output window, operand 0']
    %17 = vsyncpa [#allocation7], 0
    %18 = vsyncpa [#allocation8], 0
    %s19 = scalar_lea.sflag [#allocation8], 1
    %20 = vsyncpa %s19, 0
    loop: start=0, step=1, limit=4
    $region2: #{tpu_custom_call.1} parent=1 // loop_pre_header
      _
    $region3: #{tpu_custom_call.1} parent=1 // loop_header
      %s22 = sphi 0, %s26
      %p23 = scmp.ge.s32.totalorder %s22, 4
      %s30 = sphi 0, %s30
      %s32 = sphi 0, %s30
      %s33 = sphi 0, %s32
      %s47 = sphi 0, %s33
      %s53 = sphi 0, %s55
      %s56 = sphi 0, %s53
      %s57 = sphi 0, %s56
      %s73 = sphi 0, %s57
    $region4: #{tpu_custom_call.1} parent=1 // loop_header_branch
      %25 = sbr.rel (%p23) target = $region8
    $region5: #{tpu_custom_call.1} parent=1 // loop_body
      %s27 = ssub.s32 %s22, 1
      %s28 = ssub.s32 %s22, 2
      %s29 = sadd.s32 %s22, 1
      %s31 = sadd.s32 %s30, 1
      %p34 = scmp.eq.s32.totalorder %s22, 1
      %p35 = scmp.ne.s32.totalorder %s30, %s32
      %p36 = scmp.eq.s32.totalorder %s22, 0
      %p37 = por %p35, %p36
      %p38 = scmp.ne.s32.totalorder %s30, %s32
      %p39 = scmp.eq.s32.totalorder %s27, 1
      %p40 = por %p38, %p39
      %p41 = scmp.ne.s32.totalorder %s32, %s33
      %p42 = scmp.eq.s32.totalorder %s27, 0
      %p43 = por %p41, %p42
      %p44 = scmp.ne.s32.totalorder %s32, %s33
      %p45 = scmp.eq.s32.totalorder %s28, 1
      %p46 = por %p44, %p45
      %p48 = scmp.ne.s32.totalorder %s33, %s47
      %p49 = scmp.eq.s32.totalorder %s28, 0
      %p50 = por %p48, %p49
      %s51 = ssub.s32 %s22, %s29
      %p52 = scmp.eq.s32.totalorder %s51, 0
      %s54 = sadd.s32 %s53, 1
      %s55 = scalar_select %p52, %s53, %s54
      %p58 = pneg %p52
      %p59 = scmp.eq.s32.totalorder %s22, 1
      %p60 = por %p58, %p59
      %p61 = scmp.ne.s32.totalorder %s53, %s56
      %p62 = scmp.eq.s32.totalorder %s22, 0
      %p63 = por %p61, %p62
      %p64 = scmp.ne.s32.totalorder %s53, %s56
      %p65 = scmp.eq.s32.totalorder %s27, 1
      %p66 = por %p64, %p65
      %p67 = scmp.ne.s32.totalorder %s56, %s57
      %p68 = scmp.eq.s32.totalorder %s27, 0
      %p69 = por %p67, %p68
      %p70 = scmp.ne.s32.totalorder %s56, %s57
      %p71 = scmp.eq.s32.totalorder %s28, 1
      %p72 = por %p70, %p71
      %p74 = scmp.ne.s32.totalorder %s57, %s73
      %p75 = scmp.eq.s32.totalorder %s28, 0
      %p76 = por %p74, %p75
      %p77 = scmp.le.s32.totalorder 1, %s22
      %p78 = scmp.lt.s32.totalorder %s22, 3
      %p79 = pnand %p77, %p78
      %p80 = pneg %p79
      // Predicated region
      $region9: #{tpu_custom_call.1} parent=5 // pred_check
        _
      $region10: #{tpu_custom_call.1} parent=5 // pred_check_branch
        %82 = sbr.rel (%p79) target = $region12
      $region11: #{tpu_custom_call.1} parent=5 // pred_region
        %s83 = ssub.s32 %s22, 1
        // Predicated region
        $region13: #{tpu_custom_call.1} parent=11 // pred_check
          %p84 = pneg %p43
        $region14: #{tpu_custom_call.1} parent=11 // pred_check_branch
          %86 = sbr.rel (%p84) target = $region16
        $region15: #{tpu_custom_call.1} parent=11 // pred_region
          %88 = vsyncadd [#allocation7], 0
          %s89 = sshll.u32 %s2, 4
          %s90 = int_to_ptr.hbm [resolvable:$true] %s89
          %s91 = sshll.u32 [#allocation6], 4
          %s92 = int_to_ptr.vmem [resolvable:$true] %s91
          %97 = dma.hbm_to_vmem [thread:$0]  %s90, 1664, %s92, [#allocation7], 128, 128, 8
        $region16: #{tpu_custom_call.1} parent=11 // pred_fallthru
          _
      $region12: #{tpu_custom_call.1} parent=5 // pred_fallthru
        _
      %p98 = scmp.lt.s32.totalorder %s22, 2
      // Predicated region
      $region17: #{tpu_custom_call.1} parent=5 // pred_check
        %p99 = pneg %p98
      $region18: #{tpu_custom_call.1} parent=5 // pred_check_branch
        %101 = sbr.rel (%p99) target = $region20
      $region19: #{tpu_custom_call.1} parent=5 // pred_region
        _
      $region20: #{tpu_custom_call.1} parent=5 // pred_fallthru
        _
      %p102 = scmp.le.s32.totalorder 1, %s22
      %p103 = scmp.lt.s32.totalorder %s22, 3
      %p104 = pnand %p102, %p103
      %p105 = pneg %p104
      // Predicated region
      $region21: #{tpu_custom_call.1} parent=5 // pred_check
        _
      $region22: #{tpu_custom_call.1} parent=5 // pred_check_branch
        %107 = sbr.rel (%p104) target = $region24
      $region23: #{tpu_custom_call.1} parent=5 // pred_region
        %s108 = ssub.s32 %s22, 1
        // Predicated region
        $region25: #{tpu_custom_call.1} parent=23 // pred_check
          %p109 = pneg %p43
        $region26: #{tpu_custom_call.1} parent=23 // pred_check_branch
          %111 = sbr.rel (%p109) target = $region28
        $region27: #{tpu_custom_call.1} parent=23 // pred_region
          %113 = dma.done [#allocation7], 1664
        $region28: #{tpu_custom_call.1} parent=23 // pred_fallthru
          _
        %p114 = pneg %p43
        %p115 = pneg %p40
        %p116 = pneg %p69
        %p117 = pneg %p66
        %s118 = sand.u32 %s56, 1
        %s119 = scalar_lea.sflag [#allocation8], %s118
        %s120 = sand.u32 %s56, 1
        %s121 = smul.addr %s120, 8
        %s122 = scalar_lea.vmem [#allocation9], %s121
        %s123 = smul.u32 %s27, 8
        %s124 = sld [smem:[#allocation4 + %s123]]
        %s125 = scalar_lea.vmem [#allocation6], %s124
        %v126 = vld [vmem:[%s125] sm:$0x1]
        %127 = vst [vmem:[#allocation2] sm:$0x1] %v126
        %s128 = sadd.s32 %s123, 1
        %s129 = sld [smem:[#allocation4 + %s128]]
        %s130 = scalar_lea.vmem [#allocation6], %s129
        %v131 = vld [vmem:[%s130] sm:$0x1]
        %132 = vst [vmem:[#allocation2 + $0x1] sm:$0x1] %v131
        %s133 = sadd.s32 %s123, 2
        %s134 = sld [smem:[#allocation4 + %s133]]
        %s135 = scalar_lea.vmem [#allocation6], %s134
        %v136 = vld [vmem:[%s135] sm:$0x1]
        %137 = vst [vmem:[#allocation2 + $0x2] sm:$0x1] %v136
        %s138 = sadd.s32 %s123, 3
        %s139 = sld [smem:[#allocation4 + %s138]]
        %s140 = scalar_lea.vmem [#allocation6], %s139
        %v141 = vld [vmem:[%s140] sm:$0x1]
        %142 = vst [vmem:[#allocation2 + $0x3] sm:$0x1] %v141
        %s143 = sadd.s32 %s123, 4
        %s144 = sld [smem:[#allocation4 + %s143]]
        %s145 = scalar_lea.vmem [#allocation6], %s144
        %v146 = vld [vmem:[%s145] sm:$0x1]
        %147 = vst [vmem:[#allocation2 + $0x4] sm:$0x1] %v146
        %s148 = sadd.s32 %s123, 5
        %s149 = sld [smem:[#allocation4 + %s148]]
        %s150 = scalar_lea.vmem [#allocation6], %s149
        %v151 = vld [vmem:[%s150] sm:$0x1]
        %152 = vst [vmem:[#allocation2 + $0x5] sm:$0x1] %v151
        %s153 = sadd.s32 %s123, 6
        %s154 = sld [smem:[#allocation4 + %s153]]
        %s155 = scalar_lea.vmem [#allocation6], %s154
        %v156 = vld [vmem:[%s155] sm:$0x1]
        %157 = vst [vmem:[#allocation2 + $0x6] sm:$0x1] %v156
        %s158 = sadd.s32 %s123, 7
        %s159 = sld [smem:[#allocation4 + %s158]]
        %s160 = scalar_lea.vmem [#allocation6], %s159
        %v161 = vld [vmem:[%s160] sm:$0x1]
        %162 = vst [vmem:[#allocation2 + $0x7] sm:$0x1] %v161
        %v163 = vld [vmem:[#allocation2] sm:$0xff]
        %164 = vst [vmem:[%s122] sm:$0xff] %v163
        %s165 = sand.u32 %s56, 1
        %s166 = scalar_lea.sflag [#allocation8], %s165
        %s167 = sand.u32 %s56, 1
        %s168 = smul.addr %s167, 8
        %s169 = scalar_lea.vmem [#allocation9], %s168
        // Predicated region
        $region29: #{tpu_custom_call.1} parent=23 // pred_check
          %p170 = pneg %p66
        $region30: #{tpu_custom_call.1} parent=23 // pred_check_branch
          %172 = sbr.rel (%p170) target = $region32
        $region31: #{tpu_custom_call.1} parent=23 // pred_region
          %174 = vsyncadd %s166, 0
          %s175 = smul.addr %s27, 8
          %s176 = scalar_lea.hbm %s3, %s175
          %s178 = sshll.u32 %s169, 4
          %s179 = int_to_ptr.vmem [resolvable:$true] %s178
          %s180 = sshll.u32 %s176, 4
          %s181 = int_to_ptr.hbm [resolvable:$true] %s180
          %183 = dma.vmem_to_hbm [thread:$0]  %s179, 128, %s181, %s166
        $region32: #{tpu_custom_call.1} parent=23 // pred_fallthru
          _
      $region24: #{tpu_custom_call.1} parent=5 // pred_fallthru
        _
      %p184 = scmp.le.s32.totalorder 2, %s22
      // Predicated region
      $region33: #{tpu_custom_call.1} parent=5 // pred_check
        %p185 = pneg %p184
      $region34: #{tpu_custom_call.1} parent=5 // pred_check_branch
        %187 = sbr.rel (%p185) target = $region36
      $region35: #{tpu_custom_call.1} parent=5 // pred_region
        %s188 = ssub.s32 %s22, 2
        // Predicated region
        $region37: #{tpu_custom_call.1} parent=35 // pred_check
          %p189 = pneg %p72
        $region38: #{tpu_custom_call.1} parent=35 // pred_check_branch
          %191 = sbr.rel (%p189) target = $region40
        $region39: #{tpu_custom_call.1} parent=35 // pred_region
          %s192 = sand.u32 %s57, 1
          %s193 = scalar_lea.sflag [#allocation8], %s192
          %s194 = sand.u32 %s57, 1
          %s195 = smul.addr %s194, 8
          %s196 = scalar_lea.vmem [#allocation9], %s195
          %198 = dma.done %s193, 128
        $region40: #{tpu_custom_call.1} parent=35 // pred_fallthru
          _
      $region36: #{tpu_custom_call.1} parent=5 // pred_fallthru
        _
    $region6: #{tpu_custom_call.1} parent=1 // loop_footer
      %s26 = sadd.s32 1, %s22
    $region7: #{tpu_custom_call.1} parent=1 // loop_footer_branch
      %21 = sbr.rel target = $region3
    $region8: #{tpu_custom_call.1} parent=1 // loop_exit
      _
    %199 = vsyncpa [#allocation7], 1
    %s200 = scalar_lea.sflag [#allocation7], 1
    %201 = vsyncpa %s200, 1
    %202 = vsyncpa [#allocation8], 1
    %s203 = scalar_lea.sflag [#allocation8], 1
    %204 = vsyncpa %s203, 1

</llo_original>
